<compile_context>
chip_gen: v7x
topology: tpu7x:2x2x1
jax: 0.10.0
libtpu: 0.0.40
codegen_flags: <defaults>
</compile_context>

<pallas_src>
import functools

import jax
import jax.numpy as jnp
from jax import lax
from jax.experimental import pallas as pl
from jax.experimental.pallas import tpu as pltpu


def _round_up(x, m):
    return (x + m - 1) // m * m


def _composite_loss_kernel(
    token_preds_ref,    # (TB, C)   f32
    token_labels_ref,   # (TB, 1)   i32  (-1 for padded rows)
    joint_preds_ref,    # (TB, J)   f32
    joint_labels_ref,   # (TB, J)   f32
    text_emb_ref,       # (TB, Dt)  bf16
    vis_feat_ref,       # (TB, Dv)  bf16
    wt_ref,             # (Dv, Dt)  bf16  PyTorch (out,in) layout, resident
    bt_ref,             # (1, Dv)   f32
    wv_ref,             # (Dv, Dv)  bf16  resident
    bv_ref,             # (1, Dv)   f32
    out_ref,            # (1, 8, 128) f32 per-tile partial (lane/sublane dense)
    *,
    batch,
    block_b,
    token_w,
    joint_w,
    clamp_w,
):
    i = pl.program_id(0)
    tb = block_b

    # Valid-row mask: handles batch padding up to a multiple of the tile.
    row = i * tb + lax.broadcasted_iota(jnp.int32, (tb, 1), 0)
    valid = row < batch

    # ---------------- token loss: CE with hard integer labels ----------------
    logits = token_preds_ref[...]                                   # (TB, C) f32
    c = logits.shape[-1]
    m = jnp.max(logits, axis=-1, keepdims=True)
    lse = m + jnp.log(jnp.sum(jnp.exp(logits - m), axis=-1, keepdims=True))
    onehot = lax.broadcasted_iota(jnp.int32, (tb, c), 1) == token_labels_ref[...]
    sel = jnp.sum(jnp.where(onehot, logits, 0.0), axis=-1, keepdims=True)
    token_sum = jnp.sum(jnp.where(valid, lse - sel, 0.0))

    # -------- joint loss: MSE (row-masked; padded rows never contribute) -----
    diff = joint_preds_ref[...] - joint_labels_ref[...]
    joint_sum = jnp.sum(jnp.where(valid, diff * diff, 0.0))

    # ---------------- projections: bf16 MXU matmuls, f32 accumulation --------
    # Weights stay in PyTorch (out, in) layout -> contract on weight dim 1.
    dn = (((1,), (1,)), ((), ()))
    text_proj = lax.dot_general(
        text_emb_ref[...], wt_ref[...], dn,
        preferred_element_type=jnp.float32) + bt_ref[...]           # (TB, Dv) f32
    visual_proj = lax.dot_general(
        vis_feat_ref[...], wv_ref[...], dn,
        preferred_element_type=jnp.float32) + bv_ref[...]           # (TB, Dv) f32

    # --------- contrastive loss: soft-target CE, algebraically fused ---------
    #   -sum_c v * log_softmax(t)_c = lse(t) * sum_c v - sum_c v * t
    m2 = jnp.max(text_proj, axis=-1, keepdims=True)
    lse2 = m2 + jnp.log(jnp.sum(jnp.exp(text_proj - m2), axis=-1, keepdims=True))
    sum_v = jnp.sum(visual_proj, axis=-1, keepdims=True)
    dot_vt = jnp.sum(visual_proj * text_proj, axis=-1, keepdims=True)
    contrast_sum = jnp.sum(jnp.where(valid, lse2 * sum_v - dot_vt, 0.0))

    j = diff.shape[-1]
    partial = (token_w * token_sum / batch
               + joint_w * joint_sum / (batch * j)
               + clamp_w * contrast_sum / batch)
    out_ref[...] = jnp.broadcast_to(partial.astype(jnp.float32), out_ref.shape)


def composite_loss(
    token_preds,
    joint_preds,
    token_labels,
    joint_labels,
    text_embeddings,
    visual_features,
    text_proj_w,      # (Dv, Dt)  PyTorch Linear layout (out, in) -- NOT transposed here
    text_proj_b,      # (Dv,)
    visual_proj_w,    # (Dv, Dv)
    visual_proj_b,    # (Dv,)
    *,
    token_loss_weight=1.0,
    joint_loss_weight=1.0,
    clamp_loss_weight=1.0,
    block_b=128,
):
    B, C = token_preds.shape
    J = joint_preds.shape[1]
    Dt = text_embeddings.shape[1]
    Dv = visual_features.shape[1]

    # Loss-side operands stay f32; projection operands go to bf16 (native MXU
    # dtype, halves the dominant weight HBM bytes). No weight transpose.
    token_preds = token_preds.astype(jnp.float32)
    joint_preds = joint_preds.astype(jnp.float32)
    joint_labels = joint_labels.astype(jnp.float32)
    text_emb = text_embeddings.astype(jnp.bfloat16)
    vis_feat = visual_features.astype(jnp.bfloat16)
    wt = text_proj_w.astype(jnp.bfloat16)                 # (Dv, Dt)
    wv = visual_proj_w.astype(jnp.bfloat16)               # (Dv, Dv)
    bt = text_proj_b.astype(jnp.float32).reshape(1, Dv)
    bv = visual_proj_b.astype(jnp.float32).reshape(1, Dv)
    labels = token_labels.astype(jnp.int32).reshape(B, 1)

    # Batch tiling (pad to a multiple of TB only when needed; padded rows are
    # row-masked in-kernel so their contents never contribute).
    TB = min(int(block_b), _round_up(B, 8))
    TB = _round_up(TB, 8)
    num_tiles = pl.cdiv(B, TB)
    B_pad = num_tiles * TB
    pad = B_pad - B
    if pad:
        token_preds = jnp.pad(token_preds, ((0, pad), (0, 0)))
        labels = jnp.pad(labels, ((0, pad), (0, 0)), constant_values=-1)
        joint_preds = jnp.pad(joint_preds, ((0, pad), (0, 0)))
        joint_labels = jnp.pad(joint_labels, ((0, pad), (0, 0)))
        text_emb = jnp.pad(text_emb, ((0, pad), (0, 0)))
        vis_feat = jnp.pad(vis_feat, ((0, pad), (0, 0)))

    kernel = functools.partial(
        _composite_loss_kernel,
        batch=int(B),
        block_b=int(TB),
        token_w=float(token_loss_weight),
        joint_w=float(joint_loss_weight),
        clamp_w=float(clamp_loss_weight),
    )

    grid_spec = pltpu.PrefetchScalarGridSpec(
        num_scalar_prefetch=0,
        grid=(num_tiles,),
        in_specs=[
            pl.BlockSpec((TB, C), lambda i: (i, 0)),
            pl.BlockSpec((TB, 1), lambda i: (i, 0)),
            pl.BlockSpec((TB, J), lambda i: (i, 0)),
            pl.BlockSpec((TB, J), lambda i: (i, 0)),
            pl.BlockSpec((TB, Dt), lambda i: (i, 0)),
            pl.BlockSpec((TB, Dv), lambda i: (i, 0)),
            pl.BlockSpec((Dv, Dt), lambda i: (0, 0)),   # wt: resident across tiles
            pl.BlockSpec((1, Dv), lambda i: (0, 0)),
            pl.BlockSpec((Dv, Dv), lambda i: (0, 0)),   # wv: resident across tiles
            pl.BlockSpec((1, Dv), lambda i: (0, 0)),
        ],
        out_specs=pl.BlockSpec((1, 8, 128), lambda i: (i, 0, 0)),
    )

    # Advisory cost hint for XLA's scheduler around the custom call.
    bytes_accessed = (
        token_preds.size * 4 + labels.size * 4
        + joint_preds.size * 4 + joint_labels.size * 4
        + text_emb.size * 2 + vis_feat.size * 2
        + wt.size * 2 + wv.size * 2 + bt.size * 4 + bv.size * 4
        + num_tiles * 8 * 128 * 4
    )
    cost = pl.CostEstimate(
        flops=2 * B_pad * Dv * (Dt + Dv) + 8 * B_pad * (C + J + Dv),
        transcendentals=B_pad * (C + Dv + 2),
        bytes_accessed=int(bytes_accessed),
    )

    # TODO(synk): for very large Dv on v7x (64 MiB VMEM) additionally tile wv
    # over its output-column dimension with an extra 'arbitrary' grid axis.
    partials = pl.pallas_call(
        kernel,
        out_shape=jax.ShapeDtypeStruct((num_tiles, 8, 128), jnp.float32),
        grid_spec=grid_spec,
        compiler_params=pltpu.CompilerParams(
            dimension_semantics=("parallel",),
            vmem_limit_bytes=32 * 1024 * 1024,
        ),
        cost_estimate=cost,
    )(token_preds, labels, joint_preds, joint_labels,
      text_emb, vis_feat, wt, bt, wv, bv)

    return jnp.sum(partials[:, 0, 0])


def _reference(token_preds, joint_preds, token_labels, joint_labels,
               text_embeddings, visual_features, wt, bt, wv, bv,
               *, matmul_dtype=jnp.float32):
    # Pure-JAX reference mirroring the PyTorch module; matmul_dtype lets us
    # also mirror the kernel's bf16-operand / f32-accumulate numerics.
    logp = jax.nn.log_softmax(token_preds.astype(jnp.float32), axis=-1)
    token_loss = -jnp.mean(jnp.take_along_axis(logp, token_labels[:, None], axis=-1))
    joint_loss = jnp.mean((joint_preds - joint_labels) ** 2)
    te = text_embeddings.astype(matmul_dtype)
    vf = visual_features.astype(matmul_dtype)
    text_proj = jnp.dot(te, wt.astype(matmul_dtype).T,
                        preferred_element_type=jnp.float32) + bt
    visual_proj = jnp.dot(vf, wv.astype(matmul_dtype).T,
                          preferred_element_type=jnp.float32) + bv
    logp2 = jax.nn.log_softmax(text_proj, axis=-1)
    contrastive = jnp.mean(-jnp.sum(visual_proj * logp2, axis=-1))
    return (token_loss + joint_loss + contrastive).astype(jnp.float32)


if __name__ == "__main__":
    B, C, J = 20, 16, 32         # batch, token classes, joint dim
    Dt, Dv = 128, 256            # small text / visual embedding dims

    key = jax.random.PRNGKey(0)
    ks = jax.random.split(key, 10)
    token_preds = jax.random.normal(ks[0], (B, C), dtype=jnp.float32)
    token_labels = jax.random.randint(ks[1], (B,), 0, C, dtype=jnp.int32)
    joint_preds = jax.random.normal(ks[2], (B, J), dtype=jnp.float32)
    joint_labels = jax.random.normal(ks[3], (B, J), dtype=jnp.float32)
    text_embeddings = jax.random.normal(ks[4], (B, Dt), dtype=jnp.float32)
    visual_features = jax.random.normal(ks[5], (B, Dv), dtype=jnp.float32)

    # PyTorch Linear layout: weight (out, in).
    wt = jax.random.uniform(ks[6], (Dv, Dt), jnp.float32, -1.0, 1.0) / jnp.sqrt(Dt)
    bt = jax.random.uniform(ks[7], (Dv,), jnp.float32, -1.0, 1.0) / jnp.sqrt(Dt)
    wv = jax.random.uniform(ks[8], (Dv, Dv), jnp.float32, -1.0, 1.0) / jnp.sqrt(Dv)
    bv = jax.random.uniform(ks[9], (Dv,), jnp.float32, -1.0, 1.0) / jnp.sqrt(Dv)

    loss = composite_loss(
        token_preds, joint_preds, token_labels, joint_labels,
        text_embeddings, visual_features, wt, bt, wv, bv,
        block_b=8,    # small tile -> exercises multi-tile grid + row masking
    )
    loss = jax.block_until_ready(loss)

    # Tight check vs a reference that mirrors the kernel's mixed precision.
    ref_bf16 = _reference(token_preds, joint_preds, token_labels, joint_labels,
                          text_embeddings, visual_features, wt, bt, wv, bv,
                          matmul_dtype=jnp.bfloat16)
    assert jnp.allclose(loss, ref_bf16, rtol=2e-3, atol=2e-2), (loss, ref_bf16)

    # Loose sanity check vs the full-f32 (PyTorch-equivalent) semantics.
    ref_f32 = _reference(token_preds, joint_preds, token_labels, joint_labels,
                         text_embeddings, visual_features, wt, bt, wv, bv,
                         matmul_dtype=jnp.float32)
    assert jnp.allclose(loss, ref_f32, rtol=5e-2, atol=1.0), (loss, ref_f32)

    # Also exercise the single-tile (no padding) fast path.
    loss_1tile = composite_loss(
        token_preds, joint_preds, token_labels, joint_labels,
        text_embeddings, visual_features, wt, bt, wv, bv,
        block_b=128,
    )
    loss_1tile = jax.block_until_ready(loss_1tile)
    assert jnp.allclose(loss, loss_1tile, rtol=1e-5, atol=1e-4), (loss, loss_1tile)

    print("KERNEL_OK")
</pallas_src>

<mosaic_0001>
module attributes {stable_mosaic.version = 11 : i64} {
  func.func @_composite_loss_kernel(%arg0: i32, %arg1: memref<8x16xf32, #tpu.memory_space<vmem>>, %arg2: memref<8x1xi32, #tpu.memory_space<vmem>>, %arg3: memref<8x32xf32, #tpu.memory_space<vmem>>, %arg4: memref<8x32xf32, #tpu.memory_space<vmem>>, %arg5: memref<8x128xbf16, #tpu.memory_space<vmem>>, %arg6: memref<8x256xbf16, #tpu.memory_space<vmem>>, %arg7: memref<256x128xbf16, #tpu.memory_space<vmem>>, %arg8: memref<1x256xf32, #tpu.memory_space<vmem>>, %arg9: memref<256x256xbf16, #tpu.memory_space<vmem>>, %arg10: memref<1x256xf32, #tpu.memory_space<vmem>>, %arg11: memref<1x8x128xf32, #tpu.memory_space<vmem>>) attributes {dimension_semantics = [#tpu.dimension_semantics<parallel>], iteration_bounds = array<i64: 3>, scalar_prefetch = 0 : i64, scratch_operands = 0 : i64, tpu.core_type = #tpu.core_type<tc>, window_params = [{transform_indices = @transform_0, window_bounds = array<i64: 8, 16>}, {transform_indices = @transform_1, window_bounds = array<i64: 8, 1>}, {transform_indices = @transform_2, window_bounds = array<i64: 8, 32>}, {transform_indices = @transform_3, window_bounds = array<i64: 8, 32>}, {transform_indices = @transform_4, window_bounds = array<i64: 8, 128>}, {transform_indices = @transform_5, window_bounds = array<i64: 8, 256>}, {pipeline_mode = #tpu.pipeline_mode<synchronous>, transform_indices = @transform_6, window_bounds = array<i64: 256, 128>}, {pipeline_mode = #tpu.pipeline_mode<synchronous>, transform_indices = @transform_7, window_bounds = array<i64: 1, 256>}, {pipeline_mode = #tpu.pipeline_mode<synchronous>, transform_indices = @transform_8, window_bounds = array<i64: 256, 256>}, {pipeline_mode = #tpu.pipeline_mode<synchronous>, transform_indices = @transform_9, window_bounds = array<i64: 1, 256>}, {transform_indices = @transform_10, window_bounds = array<i64: 1, 8, 128>}]} {
    %c8_i32 = arith.constant 8 : i32
    %0 = arith.muli %arg0, %c8_i32 : i32
    %1 = tpu.iota {dimensions = array<i32: 0>} : vector<8x1xi32>
    %2 = vector.broadcast %0 : i32 to vector<8x1xi32>
    %3 = arith.addi %2, %1 : vector<8x1xi32>
    %c20_i32 = arith.constant 20 : i32
    %4 = vector.broadcast %c20_i32 : i32 to vector<8x1xi32>
    %5 = arith.cmpi slt, %3, %4 : vector<8x1xi32>
    %c0 = arith.constant 0 : index
    %c0_0 = arith.constant 0 : index
    %6 = vector.load %arg1[%c0, %c0_0] : memref<8x16xf32, #tpu.memory_space<vmem>>, vector<8x16xf32>
    %cst = arith.constant dense<0xFF800000> : vector<8xf32>
    %7 = vector.multi_reduction <maximumf>, %6, %cst [1] : vector<8x16xf32> to vector<8xf32>
    %8 = vector.shape_cast %7 : vector<8xf32> to vector<8x1xf32>
    %9 = vector.broadcast %8 : vector<8x1xf32> to vector<8x16xf32>
    %10 = arith.subf %6, %9 : vector<8x16xf32>
    %11 = math.exp %10 : vector<8x16xf32>
    %cst_1 = arith.constant dense<0.000000e+00> : vector<8xf32>
    %12 = vector.multi_reduction <add>, %11, %cst_1 [1] : vector<8x16xf32> to vector<8xf32>
    %13 = vector.shape_cast %12 : vector<8xf32> to vector<8x1xf32>
    %14 = math.log %13 : vector<8x1xf32>
    %15 = arith.addf %8, %14 : vector<8x1xf32>
    %16 = tpu.iota {dimensions = array<i32: 1>} : vector<8x16xi32>
    %c0_2 = arith.constant 0 : index
    %c0_3 = arith.constant 0 : index
    %17 = vector.load %arg2[%c0_2, %c0_3] : memref<8x1xi32, #tpu.memory_space<vmem>>, vector<8x1xi32>
    %18 = vector.broadcast %17 : vector<8x1xi32> to vector<8x16xi32>
    %19 = arith.cmpi eq, %16, %18 : vector<8x16xi32>
    %cst_4 = arith.constant 0.000000e+00 : f32
    %20 = vector.broadcast %cst_4 : f32 to vector<8x16xf32>
    %21 = arith.select %19, %6, %20 : vector<8x16xi1>, vector<8x16xf32>
    %cst_5 = arith.constant dense<0.000000e+00> : vector<8xf32>
    %22 = vector.multi_reduction <add>, %21, %cst_5 [1] : vector<8x16xf32> to vector<8xf32>
    %23 = vector.shape_cast %22 : vector<8xf32> to vector<8x1xf32>
    %24 = arith.subf %15, %23 : vector<8x1xf32>
    %cst_6 = arith.constant 0.000000e+00 : f32
    %25 = vector.broadcast %cst_6 : f32 to vector<8x1xf32>
    %26 = arith.select %5, %24, %25 : vector<8x1xi1>, vector<8x1xf32>
    %27 = vector.shape_cast %26 : vector<8x1xf32> to vector<1x8x1xf32>
    %cst_7 = arith.constant dense<0.000000e+00> : vector<1xf32>
    %28 = vector.multi_reduction <add>, %27, %cst_7 [1, 2] : vector<1x8x1xf32> to vector<1xf32>
    %29 = vector.shape_cast %28 : vector<1xf32> to vector<1x1x1xf32>
    %30 = vector.extract %29[0, 0, 0] : f32 from vector<1x1x1xf32>
    %c0_8 = arith.constant 0 : index
    %c0_9 = arith.constant 0 : index
    %31 = vector.load %arg3[%c0_8, %c0_9] : memref<8x32xf32, #tpu.memory_space<vmem>>, vector<8x32xf32>
    %c0_10 = arith.constant 0 : index
    %c0_11 = arith.constant 0 : index
    %32 = vector.load %arg4[%c0_10, %c0_11] : memref<8x32xf32, #tpu.memory_space<vmem>>, vector<8x32xf32>
    %33 = arith.subf %31, %32 : vector<8x32xf32>
    %34 = arith.mulf %33, %33 : vector<8x32xf32>
    %cst_12 = arith.constant 0.000000e+00 : f32
    %35 = vector.shape_cast %5 : vector<8x1xi1> to vector<8x1xi1>
    %36 = vector.broadcast %35 : vector<8x1xi1> to vector<8x32xi1>
    %37 = vector.broadcast %cst_12 : f32 to vector<8x32xf32>
    %38 = arith.select %36, %34, %37 : vector<8x32xi1>, vector<8x32xf32>
    %39 = vector.shape_cast %38 : vector<8x32xf32> to vector<1x8x32xf32>
    %cst_13 = arith.constant dense<0.000000e+00> : vector<1xf32>
    %40 = vector.multi_reduction <add>, %39, %cst_13 [1, 2] : vector<1x8x32xf32> to vector<1xf32>
    %41 = vector.shape_cast %40 : vector<1xf32> to vector<1x1x1xf32>
    %42 = vector.extract %41[0, 0, 0] : f32 from vector<1x1x1xf32>
    %c0_14 = arith.constant 0 : index
    %c0_15 = arith.constant 0 : index
    %43 = vector.load %arg5[%c0_14, %c0_15] : memref<8x128xbf16, #tpu.memory_space<vmem>>, vector<8x128xbf16>
    %c0_16 = arith.constant 0 : index
    %c0_17 = arith.constant 0 : index
    %44 = vector.load %arg7[%c0_16, %c0_17] : memref<256x128xbf16, #tpu.memory_space<vmem>>, vector<256x128xbf16>
    %cst_18 = arith.constant dense<0.000000e+00> : vector<8x256xf32>
    %45 = tpu.matmul %43, %44, %cst_18 {dimension_numbers = #tpu.dot_dimension_numbers<[1], [1], [0], [0], [0, 0, 1, 0], [], []>} : vector<8x128xbf16>, vector<256x128xbf16>, vector<8x256xf32> -> vector<8x256xf32>
    %c0_19 = arith.constant 0 : index
    %c0_20 = arith.constant 0 : index
    %46 = vector.load %arg8[%c0_19, %c0_20] : memref<1x256xf32, #tpu.memory_space<vmem>>, vector<1x256xf32>
    %47 = vector.broadcast %46 : vector<1x256xf32> to vector<8x256xf32>
    %48 = arith.addf %45, %47 : vector<8x256xf32>
    %c0_21 = arith.constant 0 : index
    %c0_22 = arith.constant 0 : index
    %49 = vector.load %arg6[%c0_21, %c0_22] : memref<8x256xbf16, #tpu.memory_space<vmem>>, vector<8x256xbf16>
    %c0_23 = arith.constant 0 : index
    %c0_24 = arith.constant 0 : index
    %50 = vector.load %arg9[%c0_23, %c0_24] : memref<256x256xbf16, #tpu.memory_space<vmem>>, vector<256x256xbf16>
    %cst_25 = arith.constant dense<0.000000e+00> : vector<8x256xf32>
    %51 = tpu.matmul %49, %50, %cst_25 {dimension_numbers = #tpu.dot_dimension_numbers<[1], [1], [0], [0], [0, 0, 1, 0], [], []>} : vector<8x256xbf16>, vector<256x256xbf16>, vector<8x256xf32> -> vector<8x256xf32>
    %c0_26 = arith.constant 0 : index
    %c0_27 = arith.constant 0 : index
    %52 = vector.load %arg10[%c0_26, %c0_27] : memref<1x256xf32, #tpu.memory_space<vmem>>, vector<1x256xf32>
    %53 = vector.broadcast %52 : vector<1x256xf32> to vector<8x256xf32>
    %54 = arith.addf %51, %53 : vector<8x256xf32>
    %cst_28 = arith.constant dense<0xFF800000> : vector<8xf32>
    %55 = vector.multi_reduction <maximumf>, %48, %cst_28 [1] : vector<8x256xf32> to vector<8xf32>
    %56 = vector.shape_cast %55 : vector<8xf32> to vector<8x1xf32>
    %57 = vector.broadcast %56 : vector<8x1xf32> to vector<8x256xf32>
    %58 = arith.subf %48, %57 : vector<8x256xf32>
    %59 = math.exp %58 : vector<8x256xf32>
    %cst_29 = arith.constant dense<0.000000e+00> : vector<8xf32>
    %60 = vector.multi_reduction <add>, %59, %cst_29 [1] : vector<8x256xf32> to vector<8xf32>
    %61 = vector.shape_cast %60 : vector<8xf32> to vector<8x1xf32>
    %62 = math.log %61 : vector<8x1xf32>
    %63 = arith.addf %56, %62 : vector<8x1xf32>
    %cst_30 = arith.constant dense<0.000000e+00> : vector<8xf32>
    %64 = vector.multi_reduction <add>, %54, %cst_30 [1] : vector<8x256xf32> to vector<8xf32>
    %65 = vector.shape_cast %64 : vector<8xf32> to vector<8x1xf32>
    %66 = arith.mulf %54, %48 : vector<8x256xf32>
    %cst_31 = arith.constant dense<0.000000e+00> : vector<8xf32>
    %67 = vector.multi_reduction <add>, %66, %cst_31 [1] : vector<8x256xf32> to vector<8xf32>
    %68 = vector.shape_cast %67 : vector<8xf32> to vector<8x1xf32>
    %69 = arith.mulf %63, %65 : vector<8x1xf32>
    %70 = arith.subf %69, %68 : vector<8x1xf32>
    %cst_32 = arith.constant 0.000000e+00 : f32
    %71 = vector.broadcast %cst_32 : f32 to vector<8x1xf32>
    %72 = arith.select %5, %70, %71 : vector<8x1xi1>, vector<8x1xf32>
    %73 = vector.shape_cast %72 : vector<8x1xf32> to vector<1x8x1xf32>
    %cst_33 = arith.constant dense<0.000000e+00> : vector<1xf32>
    %74 = vector.multi_reduction <add>, %73, %cst_33 [1, 2] : vector<1x8x1xf32> to vector<1xf32>
    %75 = vector.shape_cast %74 : vector<1xf32> to vector<1x1x1xf32>
    %76 = vector.extract %75[0, 0, 0] : f32 from vector<1x1x1xf32>
    %cst_34 = arith.constant 1.000000e+00 : f32
    %77 = arith.mulf %cst_34, %30 : f32
    %cst_35 = arith.constant 2.000000e+01 : f32
    %78 = arith.divf %77, %cst_35 : f32
    %cst_36 = arith.constant 1.000000e+00 : f32
    %79 = arith.mulf %cst_36, %42 : f32
    %cst_37 = arith.constant 6.400000e+02 : f32
    %80 = arith.divf %79, %cst_37 : f32
    %81 = arith.addf %78, %80 : f32
    %cst_38 = arith.constant 1.000000e+00 : f32
    %82 = arith.mulf %cst_38, %76 : f32
    %cst_39 = arith.constant 2.000000e+01 : f32
    %83 = arith.divf %82, %cst_39 : f32
    %84 = arith.addf %81, %83 : f32
    %85 = vector.broadcast %84 : f32 to vector<1x8x128xf32>
    %c0_40 = arith.constant 0 : index
    %c0_41 = arith.constant 0 : index
    %c0_42 = arith.constant 0 : index
    %86 = vector.load %arg11[%c0_40, %c0_41, %c0_42] : memref<1x8x128xf32, #tpu.memory_space<vmem>>, vector<1x8x128xf32>
    tpu.vector_store %arg11[%c0_40, %c0_41, %c0_42], %85 {strides = array<i32>} : memref<1x8x128xf32, #tpu.memory_space<vmem>>, vector<1x8x128xf32>,
    return
  }
  func.func @transform_0(%arg0: i32) -> (i32, i32) {
    %c0_i32 = arith.constant 0 : i32
    %c0_i32_0 = arith.constant 0 : i32
    return %arg0, %c0_i32 : i32, i32
  }
  func.func @transform_1(%arg0: i32) -> (i32, i32) {
    %c0_i32 = arith.constant 0 : i32
    %c0_i32_0 = arith.constant 0 : i32
    return %arg0, %c0_i32 : i32, i32
  }
  func.func @transform_2(%arg0: i32) -> (i32, i32) {
    %c0_i32 = arith.constant 0 : i32
    %c0_i32_0 = arith.constant 0 : i32
    return %arg0, %c0_i32 : i32, i32
  }
  func.func @transform_3(%arg0: i32) -> (i32, i32) {
    %c0_i32 = arith.constant 0 : i32
    %c0_i32_0 = arith.constant 0 : i32
    return %arg0, %c0_i32 : i32, i32
  }
  func.func @transform_4(%arg0: i32) -> (i32, i32) {
    %c0_i32 = arith.constant 0 : i32
    %c0_i32_0 = arith.constant 0 : i32
    return %arg0, %c0_i32 : i32, i32
  }
  func.func @transform_5(%arg0: i32) -> (i32, i32) {
    %c0_i32 = arith.constant 0 : i32
    %c0_i32_0 = arith.constant 0 : i32
    return %arg0, %c0_i32 : i32, i32
  }
  func.func @transform_6(%arg0: i32) -> (i32, i32) {
    %c0_i32 = arith.constant 0 : i32
    %c0_i32_0 = arith.constant 0 : i32
    %c0_i32_1 = arith.constant 0 : i32
    return %c0_i32, %c0_i32_0 : i32, i32
  }
  func.func @transform_7(%arg0: i32) -> (i32, i32) {
    %c0_i32 = arith.constant 0 : i32
    %c0_i32_0 = arith.constant 0 : i32
    %c0_i32_1 = arith.constant 0 : i32
    return %c0_i32, %c0_i32_0 : i32, i32
  }
  func.func @transform_8(%arg0: i32) -> (i32, i32) {
    %c0_i32 = arith.constant 0 : i32
    %c0_i32_0 = arith.constant 0 : i32
    %c0_i32_1 = arith.constant 0 : i32
    return %c0_i32, %c0_i32_0 : i32, i32
  }
  func.func @transform_9(%arg0: i32) -> (i32, i32) {
    %c0_i32 = arith.constant 0 : i32
    %c0_i32_0 = arith.constant 0 : i32
    %c0_i32_1 = arith.constant 0 : i32
    return %c0_i32, %c0_i32_0 : i32, i32
  }
  func.func @transform_10(%arg0: i32) -> (i32, i32, i32) {
    %c0_i32 = arith.constant 0 : i32
    %c0_i32_0 = arith.constant 0 : i32
    %c0_i32_1 = arith.constant 0 : i32
    return %arg0, %c0_i32, %c0_i32_0 : i32, i32, i32
  }
}

</mosaic_0001>

<llo_original>
// kernel: tpu_custom_call.1
$region0: #{tpu_custom_call.1}
  #allocation0 [shape = 'u32[]', space=smem, size = 0x4, offset = 0x4, fixed_abs, tag = 'smem constant byte address 0x4 - core index']
  #allocation1 [shape = 'u32[144,128]{1,0:T(1,128)}', space=vmem, size = 0x12000, scoped, tag = 'internal scratch']
  %s0 = inlined_call_operand.vmem [shape: f32[24,16], index: 0, kind: input, shape index: {}]
  %s1 = inlined_call_operand.vmem [shape: s32[24,1], index: 1, kind: input, shape index: {}]
  %s2 = inlined_call_operand.vmem [shape: f32[24,32], index: 2, kind: input, shape index: {}]
  %s3 = inlined_call_operand.vmem [shape: f32[24,32], index: 3, kind: input, shape index: {}]
  %s4 = inlined_call_operand.hbm [shape: bf16[24,128], index: 4, kind: input, shape index: {}]
  %s5 = inlined_call_operand.vmem [shape: bf16[24,256], index: 5, kind: input, shape index: {}]
  %s6 = inlined_call_operand.hbm [shape: bf16[256,128], index: 6, kind: input, shape index: {}]
  %s7 = inlined_call_operand.vmem [shape: f32[1,256], index: 7, kind: input, shape index: {}]
  %s8 = inlined_call_operand.hbm [shape: bf16[256,256], index: 8, kind: input, shape index: {}]
  %s9 = inlined_call_operand.vmem [shape: f32[1,256], index: 9, kind: input, shape index: {}]
  %s10 = inlined_call_operand.hbm [shape: f32[3,8,128], index: 10, kind: output, shape index: {}]
  %s11 = sld [smem:[#allocation0]]
  $region85: #{tpu_custom_call.1} parent=0
    _
  %s13 = ssub.s32 1, %s11
  %s14 = scalar_select 0, %s13, %s11
  $region1: #{tpu_custom_call.1} parent=0
    #allocation2 [shape = 'u8[4096]{0}', space=vmem, size = 0x1000, scoped, tag = 'input window, operand 4']
    #allocation3 [shape = 's32[2]{0}', space=sflag, size = 0x8, scoped, tag = 'scoped memory for tpu_custom_call.1']
    #allocation4 [shape = 's32[2]{0}', space=sflag, size = 0x8, scoped, tag = 'scoped memory for tpu_custom_call.1']
    #allocation5 [shape = 'u8[65536]{0}', space=vmem, size = 0x10000, scoped, tag = 'input window, operand 6, single buffered']
    #allocation6 [shape = 's32[1]{0}', space=sflag, size = 0x4, scoped, tag = 'scoped memory for tpu_custom_call.1']
    #allocation7 [shape = 'u8[131072]{0}', space=vmem, size = 0x20000, scoped, tag = 'input window, operand 8, single buffered']
    #allocation8 [shape = 'u8[8192]{0}', space=vmem, size = 0x2000, scoped, tag = 'output window, operand 0']
    %15 = vsyncpa [#allocation3], 0
    %s16 = scalar_lea.sflag [#allocation3], 1
    %17 = vsyncpa %s16, 0
    %18 = vsyncpa [#allocation6], 0
    %19 = vsyncpa [#allocation4], 0
    %s20 = scalar_lea.sflag [#allocation4], 1
    %21 = vsyncpa %s20, 0
    loop: start=0, step=1, limit=5
    $region2: #{tpu_custom_call.1} parent=1 // loop_pre_header
      _
    $region3: #{tpu_custom_call.1} parent=1 // loop_header
      %s23 = sphi 0, %s27
      %p24 = scmp.ge.s32.totalorder %s23, 5
      %s33 = sphi 0, %s35
      %s36 = sphi 0, %s33
      %s37 = sphi 0, %s36
      %s53 = sphi 0, %s37
      %s59 = sphi 0, %s61
      %s62 = sphi 0, %s59
      %s63 = sphi 0, %s62
      %s79 = sphi 0, %s63
      %s85 = sphi 0, %s87
      %s88 = sphi 0, %s85
      %s89 = sphi 0, %s88
      %s105 = sphi 0, %s89
      %s111 = sphi 0, %s113
      %s114 = sphi 0, %s111
      %s115 = sphi 0, %s114
      %s131 = sphi 0, %s115
      %s137 = sphi 0, %s139
      %s140 = sphi 0, %s137
      %s141 = sphi 0, %s140
      %s157 = sphi 0, %s141
      %s163 = sphi 0, %s165
      %s166 = sphi 0, %s163
      %s167 = sphi 0, %s166
      %s183 = sphi 0, %s167
      %s187 = sphi 0, %s187
      %s189 = sphi 0, %s187
      %s190 = sphi 0, %s189
      %s204 = sphi 0, %s190
      %s208 = sphi 0, %s208
      %s210 = sphi 0, %s208
      %s211 = sphi 0, %s210
      %s225 = sphi 0, %s211
      %s229 = sphi 0, %s229
      %s231 = sphi 0, %s229
      %s232 = sphi 0, %s231
      %s246 = sphi 0, %s232
      %s250 = sphi 0, %s250
      %s252 = sphi 0, %s250
      %s253 = sphi 0, %s252
      %s267 = sphi 0, %s253
      %s273 = sphi 0, %s275
      %s276 = sphi 0, %s273
      %s277 = sphi 0, %s276
      %s293 = sphi 0, %s277
    $region4: #{tpu_custom_call.1} parent=1 // loop_header_branch
      %26 = sbr.rel (%p24) target = $region8
    $region5: #{tpu_custom_call.1} parent=1 // loop_body
      %s28 = ssub.s32 %s23, 1
      %s29 = ssub.s32 %s23, 2
      %s30 = sadd.s32 %s23, 1
      %s31 = ssub.s32 %s23, %s30
      %p32 = scmp.eq.s32.totalorder %s31, 0
      %s34 = sadd.s32 %s33, 1
      %s35 = scalar_select %p32, %s33, %s34
      %p38 = pneg %p32
      %p39 = scmp.eq.s32.totalorder %s23, 2
      %p40 = por %p38, %p39
      %p41 = scmp.ne.s32.totalorder %s33, %s36
      %p42 = scmp.eq.s32.totalorder %s23, 0
      %p43 = por %p41, %p42
      %p44 = scmp.ne.s32.totalorder %s33, %s36
      %p45 = scmp.eq.s32.totalorder %s28, 2
      %p46 = por %p44, %p45
      %p47 = scmp.ne.s32.totalorder %s36, %s37
      %p48 = scmp.eq.s32.totalorder %s28, 0
      %p49 = por %p47, %p48
      %p50 = scmp.ne.s32.totalorder %s36, %s37
      %p51 = scmp.eq.s32.totalorder %s29, 2
      %p52 = por %p50, %p51
      %p54 = scmp.ne.s32.totalorder %s37, %s53
      %p55 = scmp.eq.s32.totalorder %s29, 0
      %p56 = por %p54, %p55
      %s57 = ssub.s32 %s23, %s30
      %p58 = scmp.eq.s32.totalorder %s57, 0
      %s60 = sadd.s32 %s59, 1
      %s61 = scalar_select %p58, %s59, %s60
      %p64 = pneg %p58
      %p65 = scmp.eq.s32.totalorder %s23, 2
      %p66 = por %p64, %p65
      %p67 = scmp.ne.s32.totalorder %s59, %s62
      %p68 = scmp.eq.s32.totalorder %s23, 0
      %p69 = por %p67, %p68
      %p70 = scmp.ne.s32.totalorder %s59, %s62
      %p71 = scmp.eq.s32.totalorder %s28, 2
      %p72 = por %p70, %p71
      %p73 = scmp.ne.s32.totalorder %s62, %s63
      %p74 = scmp.eq.s32.totalorder %s28, 0
      %p75 = por %p73, %p74
      %p76 = scmp.ne.s32.totalorder %s62, %s63
      %p77 = scmp.eq.s32.totalorder %s29, 2
      %p78 = por %p76, %p77
      %p80 = scmp.ne.s32.totalorder %s63, %s79
      %p81 = scmp.eq.s32.totalorder %s29, 0
      %p82 = por %p80, %p81
      %s83 = ssub.s32 %s23, %s30
      %p84 = scmp.eq.s32.totalorder %s83, 0
      %s86 = sadd.s32 %s85, 1
      %s87 = scalar_select %p84, %s85, %s86
      %p90 = pneg %p84
      %p91 = scmp.eq.s32.totalorder %s23, 2
      %p92 = por %p90, %p91
      %p93 = scmp.ne.s32.totalorder %s85, %s88
      %p94 = scmp.eq.s32.totalorder %s23, 0
      %p95 = por %p93, %p94
      %p96 = scmp.ne.s32.totalorder %s85, %s88
      %p97 = scmp.eq.s32.totalorder %s28, 2
      %p98 = por %p96, %p97
      %p99 = scmp.ne.s32.totalorder %s88, %s89
      %p100 = scmp.eq.s32.totalorder %s28, 0
      %p101 = por %p99, %p100
      %p102 = scmp.ne.s32.totalorder %s88, %s89
      %p103 = scmp.eq.s32.totalorder %s29, 2
      %p104 = por %p102, %p103
      %p106 = scmp.ne.s32.totalorder %s89, %s105
      %p107 = scmp.eq.s32.totalorder %s29, 0
      %p108 = por %p106, %p107
      %s109 = ssub.s32 %s23, %s30
      %p110 = scmp.eq.s32.totalorder %s109, 0
      %s112 = sadd.s32 %s111, 1
      %s113 = scalar_select %p110, %s111, %s112
      %p116 = pneg %p110
      %p117 = scmp.eq.s32.totalorder %s23, 2
      %p118 = por %p116, %p117
      %p119 = scmp.ne.s32.totalorder %s111, %s114
      %p120 = scmp.eq.s32.totalorder %s23, 0
      %p121 = por %p119, %p120
      %p122 = scmp.ne.s32.totalorder %s111, %s114
      %p123 = scmp.eq.s32.totalorder %s28, 2
      %p124 = por %p122, %p123
      %p125 = scmp.ne.s32.totalorder %s114, %s115
      %p126 = scmp.eq.s32.totalorder %s28, 0
      %p127 = por %p125, %p126
      %p128 = scmp.ne.s32.totalorder %s114, %s115
      %p129 = scmp.eq.s32.totalorder %s29, 2
      %p130 = por %p128, %p129
      %p132 = scmp.ne.s32.totalorder %s115, %s131
      %p133 = scmp.eq.s32.totalorder %s29, 0
      %p134 = por %p132, %p133
      %s135 = ssub.s32 %s23, %s30
      %p136 = scmp.eq.s32.totalorder %s135, 0
      %s138 = sadd.s32 %s137, 1
      %s139 = scalar_select %p136, %s137, %s138
      %p142 = pneg %p136
      %p143 = scmp.eq.s32.totalorder %s23, 2
      %p144 = por %p142, %p143
      %p145 = scmp.ne.s32.totalorder %s137, %s140
      %p146 = scmp.eq.s32.totalorder %s23, 0
      %p147 = por %p145, %p146
      %p148 = scmp.ne.s32.totalorder %s137, %s140
      %p149 = scmp.eq.s32.totalorder %s28, 2
      %p150 = por %p148, %p149
      %p151 = scmp.ne.s32.totalorder %s140, %s141
      %p152 = scmp.eq.s32.totalorder %s28, 0
      %p153 = por %p151, %p152
      %p154 = scmp.ne.s32.totalorder %s140, %s141
      %p155 = scmp.eq.s32.totalorder %s29, 2
      %p156 = por %p154, %p155
      %p158 = scmp.ne.s32.totalorder %s141, %s157
      %p159 = scmp.eq.s32.totalorder %s29, 0
      %p160 = por %p158, %p159
      %s161 = ssub.s32 %s23, %s30
      %p162 = scmp.eq.s32.totalorder %s161, 0
      %s164 = sadd.s32 %s163, 1
      %s165 = scalar_select %p162, %s163, %s164
      %p168 = pneg %p162
      %p169 = scmp.eq.s32.totalorder %s23, 2
      %p170 = por %p168, %p169
      %p171 = scmp.ne.s32.totalorder %s163, %s166
      %p172 = scmp.eq.s32.totalorder %s23, 0
      %p173 = por %p171, %p172
      %p174 = scmp.ne.s32.totalorder %s163, %s166
      %p175 = scmp.eq.s32.totalorder %s28, 2
      %p176 = por %p174, %p175
      %p177 = scmp.ne.s32.totalorder %s166, %s167
      %p178 = scmp.eq.s32.totalorder %s28, 0
      %p179 = por %p177, %p178
      %p180 = scmp.ne.s32.totalorder %s166, %s167
      %p181 = scmp.eq.s32.totalorder %s29, 2
      %p182 = por %p180, %p181
      %p184 = scmp.ne.s32.totalorder %s167, %s183
      %p185 = scmp.eq.s32.totalorder %s29, 0
      %p186 = por %p184, %p185
      %s188 = sadd.s32 %s187, 1
      %p191 = scmp.eq.s32.totalorder %s23, 2
      %p192 = scmp.ne.s32.totalorder %s187, %s189
      %p193 = scmp.eq.s32.totalorder %s23, 0
      %p194 = por %p192, %p193
      %p195 = scmp.ne.s32.totalorder %s187, %s189
      %p196 = scmp.eq.s32.totalorder %s28, 2
      %p197 = por %p195, %p196
      %p198 = scmp.ne.s32.totalorder %s189, %s190
      %p199 = scmp.eq.s32.totalorder %s28, 0
      %p200 = por %p198, %p199
      %p201 = scmp.ne.s32.totalorder %s189, %s190
      %p202 = scmp.eq.s32.totalorder %s29, 2
      %p203 = por %p201, %p202
      %p205 = scmp.ne.s32.totalorder %s190, %s204
      %p206 = scmp.eq.s32.totalorder %s29, 0
      %p207 = por %p205, %p206
      %s209 = sadd.s32 %s208, 1
      %p212 = scmp.eq.s32.totalorder %s23, 2
      %p213 = scmp.ne.s32.totalorder %s208, %s210
      %p214 = scmp.eq.s32.totalorder %s23, 0
      %p215 = por %p213, %p214
      %p216 = scmp.ne.s32.totalorder %s208, %s210
      %p217 = scmp.eq.s32.totalorder %s28, 2
      %p218 = por %p216, %p217
      %p219 = scmp.ne.s32.totalorder %s210, %s211
      %p220 = scmp.eq.s32.totalorder %s28, 0
      %p221 = por %p219, %p220
      %p222 = scmp.ne.s32.totalorder %s210, %s211
      %p223 = scmp.eq.s32.totalorder %s29, 2
      %p224 = por %p222, %p223
      %p226 = scmp.ne.s32.totalorder %s211, %s225
      %p227 = scmp.eq.s32.totalorder %s29, 0
      %p228 = por %p226, %p227
      %s230 = sadd.s32 %s229, 1
      %p233 = scmp.eq.s32.totalorder %s23, 2
      %p234 = scmp.ne.s32.totalorder %s229, %s231
      %p235 = scmp.eq.s32.totalorder %s23, 0
      %p236 = por %p234, %p235
      %p237 = scmp.ne.s32.totalorder %s229, %s231
      %p238 = scmp.eq.s32.totalorder %s28, 2
      %p239 = por %p237, %p238
      %p240 = scmp.ne.s32.totalorder %s231, %s232
      %p241 = scmp.eq.s32.totalorder %s28, 0
      %p242 = por %p240, %p241
      %p243 = scmp.ne.s32.totalorder %s231, %s232
      %p244 = scmp.eq.s32.totalorder %s29, 2
      %p245 = por %p243, %p244
      %p247 = scmp.ne.s32.totalorder %s232, %s246
      %p248 = scmp.eq.s32.totalorder %s29, 0
      %p249 = por %p247, %p248
      %s251 = sadd.s32 %s250, 1
      %p254 = scmp.eq.s32.totalorder %s23, 2
      %p255 = scmp.ne.s32.totalorder %s250, %s252
      %p256 = scmp.eq.s32.totalorder %s23, 0
      %p257 = por %p255, %p256
      %p258 = scmp.ne.s32.totalorder %s250, %s252
      %p259 = scmp.eq.s32.totalorder %s28, 2
      %p260 = por %p258, %p259
      %p261 = scmp.ne.s32.totalorder %s252, %s253
      %p262 = scmp.eq.s32.totalorder %s28, 0
      %p263 = por %p261, %p262
      %p264 = scmp.ne.s32.totalorder %s252, %s253
      %p265 = scmp.eq.s32.totalorder %s29, 2
      %p266 = por %p264, %p265
      %p268 = scmp.ne.s32.totalorder %s253, %s267
      %p269 = scmp.eq.s32.totalorder %s29, 0
      %p270 = por %p268, %p269
      %s271 = ssub.s32 %s23, %s30
      %p272 = scmp.eq.s32.totalorder %s271, 0
      %s274 = sadd.s32 %s273, 1
      %s275 = scalar_select %p272, %s273, %s274
      %p278 = pneg %p272
      %p279 = scmp.eq.s32.totalorder %s23, 2
      %p280 = por %p278, %p279
      %p281 = scmp.ne.s32.totalorder %s273, %s276
      %p282 = scmp.eq.s32.totalorder %s23, 0
      %p283 = por %p281, %p282
      %p284 = scmp.ne.s32.totalorder %s273, %s276
      %p285 = scmp.eq.s32.totalorder %s28, 2
      %p286 = por %p284, %p285
      %p287 = scmp.ne.s32.totalorder %s276, %s277
      %p288 = scmp.eq.s32.totalorder %s28, 0
      %p289 = por %p287, %p288
      %p290 = scmp.ne.s32.totalorder %s276, %s277
      %p291 = scmp.eq.s32.totalorder %s29, 2
      %p292 = por %p290, %p291
      %p294 = scmp.ne.s32.totalorder %s277, %s293
      %p295 = scmp.eq.s32.totalorder %s29, 0
      %p296 = por %p294, %p295
      %p297 = scmp.le.s32.totalorder 1, %s23
      %p298 = scmp.lt.s32.totalorder %s23, 4
      %p299 = pnand %p297, %p298
      %p300 = pneg %p299
      // Predicated region
      $region9: #{tpu_custom_call.1} parent=5 // pred_check
        _
      $region10: #{tpu_custom_call.1} parent=5 // pred_check_branch
        %302 = sbr.rel (%p299) target = $region12
      $region11: #{tpu_custom_call.1} parent=5 // pred_region
        %s303 = ssub.s32 %s23, 1
        // Predicated region
        $region13: #{tpu_custom_call.1} parent=11 // pred_check
          %p304 = pneg %p200
        $region14: #{tpu_custom_call.1} parent=11 // pred_check_branch
          %306 = sbr.rel (%p304) target = $region16
        $region15: #{tpu_custom_call.1} parent=11 // pred_region
          %s308 = ssub.s32 2048, 2048
          %309 = vsyncadd [#allocation6], %s308
          %s310 = sshll.u32 [#allocation5], 4
          %s311 = int_to_ptr.vmem [resolvable:$true] %s310
          %316 = dma.hbm_to_vmem [thread:$0]  %s6, 2048, %s311, [#allocation6], 64, 64, 4
        $region16: #{tpu_custom_call.1} parent=11 // pred_fallthru
          _
        // Predicated region
        $region17: #{tpu_custom_call.1} parent=11 // pred_check
          %p317 = pneg %p221
        $region18: #{tpu_custom_call.1} parent=11 // pred_check_branch
          %319 = sbr.rel (%p317) target = $region20
        $region19: #{tpu_custom_call.1} parent=11 // pred_region
          _
        $region20: #{tpu_custom_call.1} parent=11 // pred_fallthru
          _
        // Predicated region
        $region21: #{tpu_custom_call.1} parent=11 // pred_check
          %p320 = pneg %p242
        $region22: #{tpu_custom_call.1} parent=11 // pred_check_branch
          %322 = sbr.rel (%p320) target = $region24
        $region23: #{tpu_custom_call.1} parent=11 // pred_region
          %s324 = ssub.s32 4096, 4096
          %325 = vsyncadd [#allocation6], %s324
          %s326 = sshll.u32 [#allocation7], 4
          %s327 = int_to_ptr.vmem [resolvable:$true] %s326
          %332 = dma.hbm_to_vmem [thread:$0]  %s8, 4096, %s327, [#allocation6], 128, 128, 8
        $region24: #{tpu_custom_call.1} parent=11 // pred_fallthru
          _
        // Predicated region
        $region25: #{tpu_custom_call.1} parent=11 // pred_check
          %p333 = pneg %p263
        $region26: #{tpu_custom_call.1} parent=11 // pred_check_branch
          %335 = sbr.rel (%p333) target = $region28
        $region27: #{tpu_custom_call.1} parent=11 // pred_region
          _
        $region28: #{tpu_custom_call.1} parent=11 // pred_fallthru
          _
      $region12: #{tpu_custom_call.1} parent=5 // pred_fallthru
        _
      %p336 = scmp.lt.s32.totalorder %s23, 3
      // Predicated region
      $region29: #{tpu_custom_call.1} parent=5 // pred_check
        %p337 = pneg %p336
      $region30: #{tpu_custom_call.1} parent=5 // pred_check_branch
        %339 = sbr.rel (%p337) target = $region32
      $region31: #{tpu_custom_call.1} parent=5 // pred_region
        // Predicated region
        $region33: #{tpu_custom_call.1} parent=31 // pred_check
          %p340 = pneg %p43
        $region34: #{tpu_custom_call.1} parent=31 // pred_check_branch
          %342 = sbr.rel (%p340) target = $region36
        $region35: #{tpu_custom_call.1} parent=31 // pred_region
          %p343 = scmp.lt.s32.totalorder %s23, 2
          %s344 = scalar_select %p343, %s23, 2
          %s345 = smul.addr %s344, 8
          %s346 = scalar_lea.vmem %s0, %s345
        $region36: #{tpu_custom_call.1} parent=31 // pred_fallthru
          _
        // Predicated region
        $region37: #{tpu_custom_call.1} parent=31 // pred_check
          %p347 = pneg %p69
        $region38: #{tpu_custom_call.1} parent=31 // pred_check_branch
          %349 = sbr.rel (%p347) target = $region40
        $region39: #{tpu_custom_call.1} parent=31 // pred_region
          %p350 = scmp.lt.s32.totalorder %s23, 2
          %s351 = scalar_select %p350, %s23, 2
          %s352 = smul.addr %s351, 8
          %s353 = scalar_lea.vmem %s1, %s352
        $region40: #{tpu_custom_call.1} parent=31 // pred_fallthru
          _
        // Predicated region
        $region41: #{tpu_custom_call.1} parent=31 // pred_check
          %p354 = pneg %p95
        $region42: #{tpu_custom_call.1} parent=31 // pred_check_branch
          %356 = sbr.rel (%p354) target = $region44
        $region43: #{tpu_custom_call.1} parent=31 // pred_region
          %p357 = scmp.lt.s32.totalorder %s23, 2
          %s358 = scalar_select %p357, %s23, 2
          %s359 = smul.addr %s358, 8
          %s360 = scalar_lea.vmem %s2, %s359
        $region44: #{tpu_custom_call.1} parent=31 // pred_fallthru
          _
        // Predicated region
        $region45: #{tpu_custom_call.1} parent=31 // pred_check
          %p361 = pneg %p121
        $region46: #{tpu_custom_call.1} parent=31 // pred_check_branch
          %363 = sbr.rel (%p361) target = $region48
        $region47: #{tpu_custom_call.1} parent=31 // pred_region
          %p364 = scmp.lt.s32.totalorder %s23, 2
          %s365 = scalar_select %p364, %s23, 2
          %s366 = smul.addr %s365, 8
          %s367 = scalar_lea.vmem %s3, %s366
        $region48: #{tpu_custom_call.1} parent=31 // pred_fallthru
          _
        // Predicated region
        $region49: #{tpu_custom_call.1} parent=31 // pred_check
          %p368 = pneg %p147
        $region50: #{tpu_custom_call.1} parent=31 // pred_check_branch
          %370 = sbr.rel (%p368) target = $region52
        $region51: #{tpu_custom_call.1} parent=31 // pred_region
          %s371 = sand.u32 %s137, 1
          %s372 = scalar_lea.sflag [#allocation3], %s371
          %s373 = sand.u32 %s137, 1
          %s374 = smul.addr %s373, 4
          %s375 = scalar_lea.vmem [#allocation2], %s374
          %s377 = ssub.s32 64, 64
          %378 = vsyncadd %s372, %s377
          %s379 = smul.addr %s23, 64
          %s380 = scalar_lea.hbm %s4, %s379
          %s382 = sshll.u32 %s375, 4
          %s383 = int_to_ptr.vmem [resolvable:$true] %s382
          %385 = dma.hbm_to_vmem [thread:$0]  %s380, 64, %s383, %s372
        $region52: #{tpu_custom_call.1} parent=31 // pred_fallthru
          _
        // Predicated region
        $region53: #{tpu_custom_call.1} parent=31 // pred_check
          %p386 = pneg %p173
        $region54: #{tpu_custom_call.1} parent=31 // pred_check_branch
          %388 = sbr.rel (%p386) target = $region56
        $region55: #{tpu_custom_call.1} parent=31 // pred_region
          %p389 = scmp.lt.s32.totalorder %s23, 2
          %s390 = scalar_select %p389, %s23, 2
          %s391 = smul.addr %s390, 2
          %s392 = smul.addr %s391, 4
          %s393 = scalar_lea.vmem %s5, %s392
        $region56: #{tpu_custom_call.1} parent=31 // pred_fallthru
          _
      $region32: #{tpu_custom_call.1} parent=5 // pred_fallthru
        _
      %p394 = scmp.le.s32.totalorder 1, %s23
      %p395 = scmp.lt.s32.totalorder %s23, 4
      %p396 = pnand %p394, %p395
      %p397 = pneg %p396
      // Predicated region
      $region57: #{tpu_custom_call.1} parent=5 // pred_check
        _
      $region58: #{tpu_custom_call.1} parent=5 // pred_check_branch
        %399 = sbr.rel (%p396) target = $region60
      $region59: #{tpu_custom_call.1} parent=5 // pred_region
        %s400 = ssub.s32 %s23, 1
        %s401 = sand.u32 %s140, 1
        %s402 = scalar_lea.sflag [#allocation3], %s401
        %s403 = sand.u32 %s140, 1
        %s404 = smul.addr %s403, 4
        %s405 = scalar_lea.vmem [#allocation2], %s404
        // Predicated region
        $region61: #{tpu_custom_call.1} parent=59 // pred_check
          %p406 = pneg %p153
        $region62: #{tpu_custom_call.1} parent=59 // pred_check_branch
          %408 = sbr.rel (%p406) target = $region64
        $region63: #{tpu_custom_call.1} parent=59 // pred_region
          %409 = dma.done %s402, 64
        $region64: #{tpu_custom_call.1} parent=59 // pred_fallthru
          _
        // Predicated region
        $region65: #{tpu_custom_call.1} parent=59 // pred_check
          %p410 = pneg %p200
        $region66: #{tpu_custom_call.1} parent=59 // pred_check_branch
          %412 = sbr.rel (%p410) target = $region68
        $region67: #{tpu_custom_call.1} parent=59 // pred_region
          %413 = dma.done [#allocation6], 2048
        $region68: #{tpu_custom_call.1} parent=59 // pred_fallthru
          _
        // Predicated region
        $region69: #{tpu_custom_call.1} parent=59 // pred_check
          %p414 = pneg %p242
        $region70: #{tpu_custom_call.1} parent=59 // pred_check_branch
          %416 = sbr.rel (%p414) target = $region72
        $region71: #{tpu_custom_call.1} parent=59 // pred_region
          %417 = dma.done [#allocation6], 4096
        $region72: #{tpu_custom_call.1} parent=59 // pred_fallthru
          _
        %p418 = scmp.lt.s32.totalorder %s28, 2
        %s419 = scalar_select %p418, %s28, 2
        %s420 = smul.addr %s419, 8
        %s421 = scalar_lea.vmem %s0, %s420
        %p422 = pneg %p49
        %p423 = pneg %p46
        %p424 = scmp.lt.s32.totalorder %s28, 2
        %s425 = scalar_select %p424, %s28, 2
        %s426 = smul.addr %s425, 8
        %s427 = scalar_lea.vmem %s1, %s426
        %p428 = pneg %p75
        %p429 = pneg %p72
        %p430 = scmp.lt.s32.totalorder %s28, 2
        %s431 = scalar_select %p430, %s28, 2
        %s432 = smul.addr %s431, 8
        %s433 = scalar_lea.vmem %s2, %s432
        %p434 = pneg %p101
        %p435 = pneg %p98
        %p436 = scmp.lt.s32.totalorder %s28, 2
        %s437 = scalar_select %p436, %s28, 2
        %s438 = smul.addr %s437, 8
        %s439 = scalar_lea.vmem %s3, %s438
        %p440 = pneg %p127
        %p441 = pneg %p124
        %s442 = sand.u32 %s140, 1
        %s443 = scalar_lea.sflag [#allocation3], %s442
        %s444 = sand.u32 %s140, 1
        %s445 = smul.addr %s444, 4
        %s446 = scalar_lea.vmem [#allocation2], %s445
        %p447 = pneg %p153
        %p448 = pneg %p150
        %p449 = scmp.lt.s32.totalorder %s28, 2
        %s450 = scalar_select %p449, %s28, 2
        %s451 = smul.addr %s450, 2
        %s452 = smul.addr %s451, 4
        %s453 = scalar_lea.vmem %s5, %s452
        %p454 = pneg %p179
        %p455 = pneg %p176
        %p456 = pneg %p200
        %p457 = pneg %p197
        %p458 = pneg %p221
        %p459 = pneg %p218
        %p460 = pneg %p242
        %p461 = pneg %p239
        %p462 = pneg %p263
        %p463 = pneg %p260
        %p464 = pneg %p289
        %p465 = pneg %p286
        %s466 = sand.u32 %s276, 1
        %s467 = scalar_lea.sflag [#allocation4], %s466
        %s468 = sand.u32 %s276, 1
        %s469 = smul.addr %s468, 8
        %s470 = scalar_lea.vmem [#allocation8], %s469
        %p471 = scmp.lt.s32.totalorder %s28, 2
        %s472 = scalar_select %p471, %s28, 2
        %s473 = smul.addr %s472, 8
        %s474 = scalar_lea.vmem %s0, %s473
        %p475 = scmp.lt.s32.totalorder %s28, 2
        %s476 = scalar_select %p475, %s28, 2
        %s477 = smul.addr %s476, 8
        %s478 = scalar_lea.vmem %s1, %s477
        %p479 = scmp.lt.s32.totalorder %s28, 2
        %s480 = scalar_select %p479, %s28, 2
        %s481 = smul.addr %s480, 8
        %s482 = scalar_lea.vmem %s2, %s481
        %p483 = scmp.lt.s32.totalorder %s28, 2
        %s484 = scalar_select %p483, %s28, 2
        %s485 = smul.addr %s484, 8
        %s486 = scalar_lea.vmem %s3, %s485
        %p487 = scmp.lt.s32.totalorder %s28, 2
        %s488 = scalar_select %p487, %s28, 2
        %s489 = smul.addr %s488, 2
        %s490 = smul.addr %s489, 4
        %s491 = scalar_lea.vmem %s5, %s490
        %s493 = smul.u32 %s28, 8
        %v494 = vlaneseq
        %v495 = vshrl.u32 %v494, 7
        %v496 = vstv %s493
        %v497 = vadd.s32 %v496, %v495
        %vm498 = vcmp.lt.s32.totalorder %v497, 20
        %v499 = vld [vmem:[%s474] sm:$0xff]
        %vm500 = vcmask 130048
        %v501 = vsel %vm500, %v499, -inf
        %502 = vmax.xlane.f32.xlu0 %v501
        %v503 = vpop.xlane.xlu0 %502
        %v504 = vsub.f32 %v499, %v503
        %v505 = vmul.f32 %v504, 1.442695
        %v506 = vpow.pop %v505
        %v507 = vsel %vm500, %v506, 0.0
        %508 = vadd.xlane.f32.xlu0 %v507
        %v509 = vpop.xlane.xlu0 %508
        %v510 = vlog2.pop %v509
        %v511 = vmul.f32 %v510, 0.6931472
        %v512 = vadd.f32 %v503, %v511
        %v513 = vlaneseq
        %v514 = vand.u32 %v513, 127
        %v515 = vld [vmem:[%s478] sm:$0xff]
        %516 = vset.pattern.permute.xlu0 0
        %517 = vperm.xlu0 %516, %v515
        %v518 = vpop.permute.xlu0 %517
        %vm519 = vcmp.eq.s32.totalorder %v514, %v518
        %v520 = vsel %vm519, %v499, 0.0
        %v521 = vsel %vm500, %v520, 0.0
        %522 = vadd.xlane.f32.xlu0 %v521
        %v523 = vpop.xlane.xlu0 %522
        %v524 = vsub.f32 %v512, %v523
        %v525 = vsel %vm498, %v524, 0.0
        %vm526 = vcmask 7168
        %v527 = vsel %vm526, %v525, 0.0
        %528 = vadd.xlane.f32.xlu0 %v527
        %v529 = vpop.xlane.xlu0 %528
        %v530 = vrot.slane %v529, 4
        %v531 = vadd.f32 %v529, %v530
        %v532 = vrot.slane %v531, 2
        %v533 = vadd.f32 %v531, %v532
        %v534 = vrot.slane %v533, 1
        %v535 = vadd.f32 %v533, %v534
        %s536 = vtos %v535
        %v537 = vld [vmem:[%s482] sm:$0xff]
        %v538 = vld [vmem:[%s486] sm:$0xff]
        %v539 = vsub.f32 %v537, %v538
        %v540 = vmul.f32 %v539, %v539
        %v541 = vsel %vm498, 1, 0
        %vm542 = vcmp.eq.s32.totalorder %v541, 1
        %v543 = vsel %vm542, %v540, 0.0
        %vm544 = vcmask 261120
        %v545 = vsel %vm544, %v543, 0.0
        %546 = vadd.xlane.f32.xlu0 %v545
        %v547 = vpop.xlane.xlu0 %546
        %v548 = vrot.slane %v547, 4
        %v549 = vadd.f32 %v547, %v548
        %v550 = vrot.slane %v549, 2
        %v551 = vadd.f32 %v549, %v550
        %v552 = vrot.slane %v551, 1
        %v553 = vadd.f32 %v551, %v552
        %s554 = vtos %v553
        %v555 = vld [vmem:[%s405] sm:$0xf]
        %v556 = vld [vmem:[#allocation5] sm:$0xf]
        %v557 = vld [vmem:[#allocation5 + $0x4] sm:$0xf]
        %v558 = vld [vmem:[#allocation5 + $0x8] sm:$0xf]
        %v559 = vld [vmem:[#allocation5 + $0xc] sm:$0xf]
        %v560 = vld [vmem:[#allocation5 + $0x10] sm:$0xf]
        %v561 = vld [vmem:[#allocation5 + $0x14] sm:$0xf]
        %v562 = vld [vmem:[#allocation5 + $0x18] sm:$0xf]
        %v563 = vld [vmem:[#allocation5 + $0x1c] sm:$0xf]
        %v564 = vld [vmem:[#allocation5 + $0x20] sm:$0xf]
        %v565 = vld [vmem:[#allocation5 + $0x24] sm:$0xf]
        %v566 = vld [vmem:[#allocation5 + $0x28] sm:$0xf]
        %v567 = vld [vmem:[#allocation5 + $0x2c] sm:$0xf]
        %v568 = vld [vmem:[#allocation5 + $0x30] sm:$0xf]
        %v569 = vld [vmem:[#allocation5 + $0x34] sm:$0xf]
        %v570 = vld [vmem:[#allocation5 + $0x38] sm:$0xf]
        %v571 = vld [vmem:[#allocation5 + $0x3c] sm:$0xf]
        %v572 = vld [vmem:[#allocation5 + $0x40] sm:$0xf]
        %v573 = vld [vmem:[#allocation5 + $0x44] sm:$0xf]
        %v574 = vld [vmem:[#allocation5 + $0x48] sm:$0xf]
        %v575 = vld [vmem:[#allocation5 + $0x4c] sm:$0xf]
        %v576 = vld [vmem:[#allocation5 + $0x50] sm:$0xf]
        %v577 = vld [vmem:[#allocation5 + $0x54] sm:$0xf]
        %v578 = vld [vmem:[#allocation5 + $0x58] sm:$0xf]
        %v579 = vld [vmem:[#allocation5 + $0x5c] sm:$0xf]
        %v580 = vld [vmem:[#allocation5 + $0x60] sm:$0xf]
        %v581 = vld [vmem:[#allocation5 + $0x64] sm:$0xf]
        %v582 = vld [vmem:[#allocation5 + $0x68] sm:$0xf]
        %v583 = vld [vmem:[#allocation5 + $0x6c] sm:$0xf]
        %v584 = vld [vmem:[#allocation5 + $0x70] sm:$0xf]
        %v585 = vld [vmem:[#allocation5 + $0x74] sm:$0xf]
        %v586 = vld [vmem:[#allocation5 + $0x78] sm:$0xf]
        %v587 = vld [vmem:[#allocation5 + $0x7c] sm:$0xf]
        %v588 = vld [vmem:[%s7] sm:$0x3]
        %v590 = vlaneseq
        %v591 = vshrl.u32 %v590, 7
        %v592 = vsub.s32 0, %v591
        %v593 = vrot.slane %v588, %v592
        %v594 = vlaneseq
        %v595 = vshrl.u32 %v594, 7
        %v596 = vsub.s32 1, %v595
        %v597 = vrot.slane %v588, %v596
        %v632 = vunpack.c.l.b16 %v556
        %v633 = vunpack.c.l.b16 %v557
        %v634 = vunpack.c.l.b16 %v558
        %v635 = vunpack.c.l.b16 %v559
        %v636 = vunpack.c.l.b16 %v560
        %v637 = vunpack.c.l.b16 %v561
        %v638 = vunpack.c.l.b16 %v562
        %v639 = vunpack.c.l.b16 %v563
        %v640 = vunpack.c.l.b16 %v564
        %v641 = vunpack.c.l.b16 %v565
        %v642 = vunpack.c.l.b16 %v566
        %v643 = vunpack.c.l.b16 %v567
        %v644 = vunpack.c.l.b16 %v568
        %v645 = vunpack.c.l.b16 %v569
        %v646 = vunpack.c.l.b16 %v570
        %v647 = vunpack.c.l.b16 %v571
        %v648 = vunpack.c.l.b16 %v572
        %v649 = vunpack.c.l.b16 %v573
        %v650 = vunpack.c.l.b16 %v574
        %v651 = vunpack.c.l.b16 %v575
        %v652 = vunpack.c.l.b16 %v576
        %v653 = vunpack.c.l.b16 %v577
        %v654 = vunpack.c.l.b16 %v578
        %v655 = vunpack.c.l.b16 %v579
        %v656 = vunpack.c.l.b16 %v580
        %v657 = vunpack.c.l.b16 %v581
        %v658 = vunpack.c.l.b16 %v582
        %v659 = vunpack.c.l.b16 %v583
        %v660 = vunpack.c.l.b16 %v584
        %v661 = vunpack.c.l.b16 %v585
        %v662 = vunpack.c.l.b16 %v586
        %v663 = vunpack.c.l.b16 %v587
        %v664 = vpack.c.b16 %v633, %v632
        %v665 = vpack.c.b16 %v635, %v634
        %v666 = vpack.c.b16 %v637, %v636
        %v667 = vpack.c.b16 %v639, %v638
        %v668 = vpack.c.b16 %v641, %v640
        %v669 = vpack.c.b16 %v643, %v642
        %v670 = vpack.c.b16 %v645, %v644
        %v671 = vpack.c.b16 %v647, %v646
        %v672 = vpack.c.b16 %v649, %v648
        %v673 = vpack.c.b16 %v651, %v650
        %v674 = vpack.c.b16 %v653, %v652
        %v675 = vpack.c.b16 %v655, %v654
        %v676 = vpack.c.b16 %v657, %v656
        %v677 = vpack.c.b16 %v659, %v658
        %v678 = vpack.c.b16 %v661, %v660
        %v679 = vpack.c.b16 %v663, %v662
        %696 = vmatprep.subr.bf16.mxu0 0
        %697 = vmatpush1.bf16.xpose.msra.mxu0 %v664
        %698 = vmatprep.subr.bf16.mxu0 0
        %699 = vmatpush1.bf16.xpose.msra.mxu0 %v665
        %700 = vmatprep.subr.bf16.mxu0 0
        %701 = vmatpush1.bf16.xpose.msra.mxu0 %v666
        %702 = vmatprep.subr.bf16.mxu0 0
        %703 = vmatpush1.bf16.xpose.msra.mxu0 %v667
        %704 = vmatprep.subr.bf16.mxu0 0
        %705 = vmatpush1.bf16.xpose.msra.mxu0 %v668
        %706 = vmatprep.subr.bf16.mxu0 0
        %707 = vmatpush1.bf16.xpose.msra.mxu0 %v669
        %708 = vmatprep.subr.bf16.mxu0 0
        %709 = vmatpush1.bf16.xpose.msra.mxu0 %v670
        %710 = vmatprep.subr.bf16.mxu0 0
        %711 = vmatpush1.bf16.xpose.msra.mxu0 %v671
        %712 = vmatprep.subr.bf16.mxu0 0
        %713 = vmatpush1.bf16.xpose.msra.mxu0 %v672
        %714 = vmatprep.subr.bf16.mxu0 0
        %715 = vmatpush1.bf16.xpose.msra.mxu0 %v673
        %716 = vmatprep.subr.bf16.mxu0 0
        %717 = vmatpush1.bf16.xpose.msra.mxu0 %v674
        %718 = vmatprep.subr.bf16.mxu0 0
        %719 = vmatpush1.bf16.xpose.msra.mxu0 %v675
        %720 = vmatprep.subr.bf16.mxu0 0
        %721 = vmatpush1.bf16.xpose.msra.mxu0 %v676
        %722 = vmatprep.subr.bf16.mxu0 0
        %723 = vmatpush1.bf16.xpose.msra.mxu0 %v677
        %724 = vmatprep.subr.bf16.mxu0 0
        %725 = vmatpush1.bf16.xpose.msra.mxu0 %v678
        %726 = vmatprep.subr.bf16.mxu0 0
        %727 = vmatpush1.bf16.xpose.msra.mxu0 %v679
        %728 = vmatprep.mubr.bf16.mxu0 0
        %729 = vmatmul.mubr.bf16.gmra.mrb[0].mxu0 %v555
        %v730 = vpop.f32.mrb[0].mxu0
        %v731 = vadd.f32 %v593, %v730
        %v732 = vpop.f32.mrb[0].mxu0
        %v733 = vadd.f32 %v597, %v732
        %v734 = vpop.f32.mrb[0].mxu0
        %v735 = vpop.f32.mrb[0].mxu0
        %736 = vdwg.mxu0
        %v737 = vld [vmem:[%s491] sm:$0xff]
        %v738 = vld [vmem:[#allocation7] sm:$0xff]
        %v739 = vld [vmem:[#allocation7 + $0x8] sm:$0xff]
        %v740 = vld [vmem:[#allocation7 + $0x10] sm:$0xff]
        %v741 = vld [vmem:[#allocation7 + $0x18] sm:$0xff]
        %v742 = vld [vmem:[#allocation7 + $0x20] sm:$0xff]
        %v743 = vld [vmem:[#allocation7 + $0x28] sm:$0xff]
        %v744 = vld [vmem:[#allocation7 + $0x30] sm:$0xff]
        %v745 = vld [vmem:[#allocation7 + $0x38] sm:$0xff]
        %v746 = vld [vmem:[#allocation7 + $0x40] sm:$0xff]
        %v747 = vld [vmem:[#allocation7 + $0x48] sm:$0xff]
        %v748 = vld [vmem:[#allocation7 + $0x50] sm:$0xff]
        %v749 = vld [vmem:[#allocation7 + $0x58] sm:$0xff]
        %v750 = vld [vmem:[#allocation7 + $0x60] sm:$0xff]
        %v751 = vld [vmem:[#allocation7 + $0x68] sm:$0xff]
        %v752 = vld [vmem:[#allocation7 + $0x70] sm:$0xff]
        %v753 = vld [vmem:[#allocation7 + $0x78] sm:$0xff]
        %v754 = vld [vmem:[#allocation7 + $0x80] sm:$0xff]
        %v755 = vld [vmem:[#allocation7 + $0x88] sm:$0xff]
        %v756 = vld [vmem:[#allocation7 + $0x90] sm:$0xff]
        %v757 = vld [vmem:[#allocation7 + $0x98] sm:$0xff]
        %v758 = vld [vmem:[#allocation7 + $0xa0] sm:$0xff]
        %v759 = vld [vmem:[#allocation7 + $0xa8] sm:$0xff]
        %v760 = vld [vmem:[#allocation7 + $0xb0] sm:$0xff]
        %v761 = vld [vmem:[#allocation7 + $0xb8] sm:$0xff]
        %v762 = vld [vmem:[#allocation7 + $0xc0] sm:$0xff]
        %v763 = vld [vmem:[#allocation7 + $0xc8] sm:$0xff]
        %v764 = vld [vmem:[#allocation7 + $0xd0] sm:$0xff]
        %v765 = vld [vmem:[#allocation7 + $0xd8] sm:$0xff]
        %v766 = vld [vmem:[#allocation7 + $0xe0] sm:$0xff]
        %v767 = vld [vmem:[#allocation7 + $0xe8] sm:$0xff]
        %v768 = vld [vmem:[#allocation7 + $0xf0] sm:$0xff]
        %v769 = vld [vmem:[#allocation7 + $0xf8] sm:$0xff]
        %v770 = vld [vmem:[%s9] sm:$0x3]
        %v772 = vlaneseq
        %v773 = vshrl.u32 %v772, 7
        %v774 = vsub.s32 0, %v773
        %v775 = vrot.slane %v770, %v774
        %v776 = vlaneseq
        %v777 = vshrl.u32 %v776, 7
        %v778 = vsub.s32 1, %v777
        %v779 = vrot.slane %v770, %v778
        %v783 = vunpack.c.l.b16 %v737
        %v784 = vunpack.c.h.b16 %v737
        %v785 = vpack.c.b16 %v783, %v783
        %v786 = vpack.c.b16 %v784, %v784
        %v821 = vunpack.c.l.b16 %v738
        %v822 = vunpack.c.h.b16 %v738
        %v823 = vunpack.c.l.b16 %v739
        %v824 = vunpack.c.h.b16 %v739
        %v825 = vunpack.c.l.b16 %v740
        %v826 = vunpack.c.h.b16 %v740
        %v827 = vunpack.c.l.b16 %v741
        %v828 = vunpack.c.h.b16 %v741
        %v829 = vunpack.c.l.b16 %v742
        %v830 = vunpack.c.h.b16 %v742
        %v831 = vunpack.c.l.b16 %v743
        %v832 = vunpack.c.h.b16 %v743
        %v833 = vunpack.c.l.b16 %v744
        %v834 = vunpack.c.h.b16 %v744
        %v835 = vunpack.c.l.b16 %v745
        %v836 = vunpack.c.h.b16 %v745
        %v837 = vunpack.c.l.b16 %v746
        %v838 = vunpack.c.h.b16 %v746
        %v839 = vunpack.c.l.b16 %v747
        %v840 = vunpack.c.h.b16 %v747
        %v841 = vunpack.c.l.b16 %v748
        %v842 = vunpack.c.h.b16 %v748
        %v843 = vunpack.c.l.b16 %v749
        %v844 = vunpack.c.h.b16 %v749
        %v845 = vunpack.c.l.b16 %v750
        %v846 = vunpack.c.h.b16 %v750
        %v847 = vunpack.c.l.b16 %v751
        %v848 = vunpack.c.h.b16 %v751
        %v849 = vunpack.c.l.b16 %v752
        %v850 = vunpack.c.h.b16 %v752
        %v851 = vunpack.c.l.b16 %v753
        %v852 = vunpack.c.h.b16 %v753
        %v853 = vunpack.c.l.b16 %v754
        %v854 = vunpack.c.h.b16 %v754
        %v855 = vunpack.c.l.b16 %v755
        %v856 = vunpack.c.h.b16 %v755
        %v857 = vunpack.c.l.b16 %v756
        %v858 = vunpack.c.h.b16 %v756
        %v859 = vunpack.c.l.b16 %v757
        %v860 = vunpack.c.h.b16 %v757
        %v861 = vunpack.c.l.b16 %v758
        %v862 = vunpack.c.h.b16 %v758
        %v863 = vunpack.c.l.b16 %v759
        %v864 = vunpack.c.h.b16 %v759
        %v865 = vunpack.c.l.b16 %v760
        %v866 = vunpack.c.h.b16 %v760
        %v867 = vunpack.c.l.b16 %v761
        %v868 = vunpack.c.h.b16 %v761
        %v869 = vunpack.c.l.b16 %v762
        %v870 = vunpack.c.h.b16 %v762
        %v871 = vunpack.c.l.b16 %v763
        %v872 = vunpack.c.h.b16 %v763
        %v873 = vunpack.c.l.b16 %v764
        %v874 = vunpack.c.h.b16 %v764
        %v875 = vunpack.c.l.b16 %v765
        %v876 = vunpack.c.h.b16 %v765
        %v877 = vunpack.c.l.b16 %v766
        %v878 = vunpack.c.h.b16 %v766
        %v879 = vunpack.c.l.b16 %v767
        %v880 = vunpack.c.h.b16 %v767
        %v881 = vunpack.c.l.b16 %v768
        %v882 = vunpack.c.h.b16 %v768
        %v883 = vunpack.c.l.b16 %v769
        %v884 = vunpack.c.h.b16 %v769
        %v885 = vpack.c.b16 %v823, %v821
        %v886 = vpack.c.b16 %v824, %v822
        %v887 = vpack.c.b16 %v827, %v825
        %v888 = vpack.c.b16 %v828, %v826
        %v889 = vpack.c.b16 %v831, %v829
        %v890 = vpack.c.b16 %v832, %v830
        %v891 = vpack.c.b16 %v835, %v833
        %v892 = vpack.c.b16 %v836, %v834
        %v893 = vpack.c.b16 %v839, %v837
        %v894 = vpack.c.b16 %v840, %v838
        %v895 = vpack.c.b16 %v843, %v841
        %v896 = vpack.c.b16 %v844, %v842
        %v897 = vpack.c.b16 %v847, %v845
        %v898 = vpack.c.b16 %v848, %v846
        %v899 = vpack.c.b16 %v851, %v849
        %v900 = vpack.c.b16 %v852, %v850
        %v901 = vpack.c.b16 %v855, %v853
        %v902 = vpack.c.b16 %v856, %v854
        %v903 = vpack.c.b16 %v859, %v857
        %v904 = vpack.c.b16 %v860, %v858
        %v905 = vpack.c.b16 %v863, %v861
        %v906 = vpack.c.b16 %v864, %v862
        %v907 = vpack.c.b16 %v867, %v865
        %v908 = vpack.c.b16 %v868, %v866
        %v909 = vpack.c.b16 %v871, %v869
        %v910 = vpack.c.b16 %v872, %v870
        %v911 = vpack.c.b16 %v875, %v873
        %v912 = vpack.c.b16 %v876, %v874
        %v913 = vpack.c.b16 %v879, %v877
        %v914 = vpack.c.b16 %v880, %v878
        %v915 = vpack.c.b16 %v883, %v881
        %v916 = vpack.c.b16 %v884, %v882
        %949 = vmatprep.subr.bf16.mxu0 %v886
        %950 = vmatpush1.bf16.xpose.msra.mxu0 %v885
        %951 = vmatprep.subr.bf16.mxu0 %v888
        %952 = vmatpush1.bf16.xpose.msra.mxu0 %v887
        %953 = vmatprep.subr.bf16.mxu0 %v890
        %954 = vmatpush1.bf16.xpose.msra.mxu0 %v889
        %955 = vmatprep.subr.bf16.mxu0 %v892
        %956 = vmatpush1.bf16.xpose.msra.mxu0 %v891
        %957 = vmatprep.subr.bf16.mxu0 %v894
        %958 = vmatpush1.bf16.xpose.msra.mxu0 %v893
        %959 = vmatprep.subr.bf16.mxu0 %v896
        %960 = vmatpush1.bf16.xpose.msra.mxu0 %v895
        %961 = vmatprep.subr.bf16.mxu0 %v898
        %962 = vmatpush1.bf16.xpose.msra.mxu0 %v897
        %963 = vmatprep.subr.bf16.mxu0 %v900
        %964 = vmatpush1.bf16.xpose.msra.mxu0 %v899
        %965 = vmatprep.subr.bf16.mxu0 %v902
        %966 = vmatpush1.bf16.xpose.msra.mxu0 %v901
        %967 = vmatprep.subr.bf16.mxu0 %v904
        %968 = vmatpush1.bf16.xpose.msra.mxu0 %v903
        %969 = vmatprep.subr.bf16.mxu0 %v906
        %970 = vmatpush1.bf16.xpose.msra.mxu0 %v905
        %971 = vmatprep.subr.bf16.mxu0 %v908
        %972 = vmatpush1.bf16.xpose.msra.mxu0 %v907
        %973 = vmatprep.subr.bf16.mxu0 %v910
        %974 = vmatpush1.bf16.xpose.msra.mxu0 %v909
        %975 = vmatprep.subr.bf16.mxu0 %v912
        %976 = vmatpush1.bf16.xpose.msra.mxu0 %v911
        %977 = vmatprep.subr.bf16.mxu0 %v914
        %978 = vmatpush1.bf16.xpose.msra.mxu0 %v913
        %979 = vmatprep.subr.bf16.mxu0 %v916
        %980 = vmatpush1.bf16.xpose.msra.mxu0 %v915
        %981 = vmatprep.mubr.bf16.mxu0 %v786
        %982 = vmatmul.mubr.bf16.gmra.mrb[0].mxu0 %v785
        %v983 = vpop.f32.mrb[0].mxu0
        %v984 = vadd.f32 %v775, %v983
        %v985 = vpop.f32.mrb[0].mxu0
        %v986 = vadd.f32 %v779, %v985
        %v987 = vpop.f32.mrb[0].mxu0
        %v988 = vpop.f32.mrb[0].mxu0
        %989 = vdwg.mxu0
        %v990 = vmax.f32 %v731, %v733
        %991 = vmax.xlane.f32.xlu0 %v990
        %v992 = vpop.xlane.xlu0 %991
        %v993 = vsub.f32 %v731, %v992
        %v994 = vsub.f32 %v733, %v992
        %v995 = vmul.f32 %v993, 1.442695
        %v996 = vpow.pop %v995
        %v997 = vmul.f32 %v994, 1.442695
        %v998 = vpow.pop %v997
        %v999 = vadd.f32 %v996, %v998
        %1000 = vadd.xlane.f32.xlu0 %v999
        %v1001 = vpop.xlane.xlu0 %1000
        %v1002 = vlog2.pop %v1001
        %v1003 = vmul.f32 %v1002, 0.6931472
        %v1004 = vadd.f32 %v992, %v1003
        %v1005 = vadd.f32 %v984, %v986
        %1006 = vadd.xlane.f32.xlu0 %v1005
        %v1007 = vpop.xlane.xlu0 %1006
        %v1008 = vmul.f32 %v984, %v731
        %v1009 = vmul.f32 %v986, %v733
        %v1010 = vadd.f32 %v1008, %v1009
        %1011 = vadd.xlane.f32.xlu0 %v1010
        %v1012 = vpop.xlane.xlu0 %1011
        %v1013 = vmul.f32 %v1004, %v1007
        %v1014 = vsub.f32 %v1013, %v1012
        %v1015 = vsel %vm498, %v1014, 0.0
        %v1016 = vsel %vm526, %v1015, 0.0
        %1017 = vadd.xlane.f32.xlu0 %v1016
        %v1018 = vpop.xlane.xlu0 %1017
        %v1019 = vrot.slane %v1018, 4
        %v1020 = vadd.f32 %v1018, %v1019
        %v1021 = vrot.slane %v1020, 2
        %v1022 = vadd.f32 %v1020, %v1021
        %v1023 = vrot.slane %v1022, 1
        %v1024 = vadd.f32 %v1022, %v1023
        %s1025 = vtos %v1024
        %v1026 = vrcp.pop 20.0
        %s1027 = vtos %v1026
        %s1028 = smul.f32 %s536, %s1027
        %v1029 = vrcp.pop 640.0
        %s1030 = vtos %v1029
        %s1031 = smul.f32 %s554, %s1030
        %s1032 = sadd.f32 %s1028, %s1031
        %v1033 = vrcp.pop 20.0
        %s1034 = vtos %v1033
        %s1035 = smul.f32 %s1025, %s1034
        %s1036 = sadd.f32 %s1032, %s1035
        %v1037 = vstv %s1036
        %1038 = vst [vmem:[%s470] sm:$0xff] %v1037
        %s1039 = sand.u32 %s276, 1
        %s1040 = scalar_lea.sflag [#allocation4], %s1039
        %s1041 = sand.u32 %s276, 1
        %s1042 = smul.addr %s1041, 8
        %s1043 = scalar_lea.vmem [#allocation8], %s1042
        // Predicated region
        $region73: #{tpu_custom_call.1} parent=59 // pred_check
          %p1044 = pneg %p286
        $region74: #{tpu_custom_call.1} parent=59 // pred_check_branch
          %1046 = sbr.rel (%p1044) target = $region76
        $region75: #{tpu_custom_call.1} parent=59 // pred_region
          %s1048 = ssub.s32 128, 128
          %1049 = vsyncadd %s1040, %s1048
          %s1050 = smul.addr %s28, 128
          %s1051 = scalar_lea.hbm %s10, %s1050
          %s1053 = sshll.u32 %s1043, 4
          %s1054 = int_to_ptr.vmem [resolvable:$true] %s1053
          %1056 = dma.vmem_to_hbm [thread:$0]  %s1054, 128, %s1051, %s1040
        $region76: #{tpu_custom_call.1} parent=59 // pred_fallthru
          _
      $region60: #{tpu_custom_call.1} parent=5 // pred_fallthru
        _
      %p1057 = scmp.le.s32.totalorder 2, %s23
      // Predicated region
      $region77: #{tpu_custom_call.1} parent=5 // pred_check
        %p1058 = pneg %p1057
      $region78: #{tpu_custom_call.1} parent=5 // pred_check_branch
        %1060 = sbr.rel (%p1058) target = $region80
      $region79: #{tpu_custom_call.1} parent=5 // pred_region
        %s1061 = ssub.s32 %s23, 2
        // Predicated region
        $region81: #{tpu_custom_call.1} parent=79 // pred_check
          %p1062 = pneg %p292
        $region82: #{tpu_custom_call.1} parent=79 // pred_check_branch
          %1064 = sbr.rel (%p1062) target = $region84
        $region83: #{tpu_custom_call.1} parent=79 // pred_region
          %s1065 = sand.u32 %s277, 1
          %s1066 = scalar_lea.sflag [#allocation4], %s1065
          %s1067 = sand.u32 %s277, 1
          %s1068 = smul.addr %s1067, 8
          %s1069 = scalar_lea.vmem [#allocation8], %s1068
          %1070 = dma.done %s1066, 128
        $region84: #{tpu_custom_call.1} parent=79 // pred_fallthru
          _
      $region80: #{tpu_custom_call.1} parent=5 // pred_fallthru
        _
    $region6: #{tpu_custom_call.1} parent=1 // loop_footer
      %s27 = sadd.s32 1, %s23
    $region7: #{tpu_custom_call.1} parent=1 // loop_footer_branch
      %22 = sbr.rel target = $region3
    $region8: #{tpu_custom_call.1} parent=1 // loop_exit
      _
    %1071 = vsyncpa [#allocation3], 1
    %s1072 = scalar_lea.sflag [#allocation3], 1
    %1073 = vsyncpa %s1072, 1
    %1074 = vsyncpa [#allocation6], 1
    %1075 = vsyncpa [#allocation4], 1
    %s1076 = scalar_lea.sflag [#allocation4], 1
    %1077 = vsyncpa %s1076, 1

</llo_original>
